<compile_context>
chip_gen: v7x
topology: tpu7x:2x2x1
jax: 0.10.0
libtpu: 0.0.40
codegen_flags: <defaults>
</compile_context>

<pallas_src>
import functools

import jax
import jax.numpy as jnp
from jax.experimental import pallas as pl
from jax.experimental.pallas import tpu as pltpu


def _stgcn_kernel(x_ref, wbig_ref, wt_ref, bias_ref, o_ref, *, Nb, T, VC, kt, pad):
    f32 = jnp.float32
    M = Nb * T
    x = x_ref[...].reshape(M, x_ref.shape[-1])                    # (M, V*C_in)

    # gcn (channel mix over K spatial kernels + A aggregation, BN1 scale folded)
    # and residual 1x1 conv (BNr scale folded) in ONE lane-dense matmul.
    y1 = jnp.dot(x, wbig_ref[...], preferred_element_type=f32)    # (M, 2*V*C_out)

    bias = bias_ref[...]                                          # (3, V*C_out)
    h = jnp.maximum(y1[:, :VC] + bias[0:1, :], 0.0)               # BN1 shift + ReLU
    resid = y1[:, VC:] + bias[1:2, :]                             # residual + BNr shift

    # temporal conv (kt, 1), stride 1, zero-padded in time: im2col along lanes,
    # then one matmul against the stacked (BN2-folded) temporal weights.
    h3 = h.reshape(Nb, T, VC)
    if pad > 0:
        zpad = jnp.zeros((Nb, pad, VC), f32)
        hp = jnp.concatenate([zpad, h3, zpad], axis=1)            # (Nb, T + 2*pad, VC)
    else:
        hp = h3
    cols = [hp[:, dt:dt + T, :] for dt in range(kt)]
    hcat = jnp.concatenate(cols, axis=-1).reshape(M, kt * VC)     # (M, kt*V*C_out)

    o = jnp.dot(hcat, wt_ref[...], preferred_element_type=f32)    # (M, V*C_out)
    o = jnp.maximum(o + bias[2:3, :] + resid, 0.0)                # BN2 shift + residual + ReLU

    # TODO(synk): nn.Dropout is identity in eval mode; training-mode dropout and
    # batch-statistics BN are not implemented (inference semantics only).
    o_ref[...] = o.reshape(Nb, T, VC).astype(o_ref.dtype)         # single lane-dense store


def _fold_bn(gamma, beta, mean, var, eps=1e-5):
    scale = gamma * jax.lax.rsqrt(var + eps)
    return scale, beta - mean * scale


def _pick_block_n(N, T, VCin, VC, kt, vmem_budget=10 << 20):
    """Largest divisor of N whose per-step block (double-buffered x/out tiles plus
    in-kernel intermediates: y1, h, padded h, im2col, o) stays under a conservative
    VMEM budget.  Tiny problems -> a single grid step (no per-step overhead);
    large batches tile and keep the grid axis parallel for megacore sharding."""
    per_row_bytes = 4 * (2 * VCin + (7 + kt) * VC)
    max_rows = max(T, vmem_budget // per_row_bytes)
    best = 1
    for nb in range(1, N + 1):
        if N % nb == 0 and nb * T <= max_rows:
            best = nb
    return best


def st_gcn_forward(x, A, p):
    """x: (N, C_in, T, V) NCHW (PyTorch convention); A: (K, V, V). Returns (out, A)."""
    N, C_in, T, V = x.shape
    K = A.shape[0]
    C_out = p["tcn_b"].shape[0]
    kt = p["tcn_w"].shape[-1]
    pad = (kt - 1) // 2
    VC = V * C_out
    f32 = jnp.float32
    Af = A.astype(f32)

    # -------- plain-JAX glue: fold BNs + build fused linear operators --------
    s1, b1 = _fold_bn(*p["bn1"])
    s2, b2 = _fold_bn(*p["bn2"])
    sr, brs = _fold_bn(*p["bnr"])

    # gcn: fused (v, c_in) -> (w, c_out) operator summed over spatial kernels k,
    # BN1 scale folded in.
    wg = jnp.transpose(p["gcn_w"].reshape(K, C_out, C_in), (0, 2, 1)) * s1[None, None, :]
    g_op = jnp.einsum("kvw,kic->viwc", Af, wg).reshape(V * C_in, VC)
    # residual 1x1 conv (BNr scale folded), block-diagonal over graph nodes.
    # TODO(synk): only the conv-residual path (in_channels != out_channels) is built
    # here; identity / no-residual variants would only change r_op / res_bias.
    wr = jnp.transpose(p["res_w"], (1, 0)) * sr[None, :]
    r_op = jnp.kron(jnp.eye(V, dtype=f32), wr)                              # (V*C_in, VC)
    wbig = jnp.concatenate([g_op, r_op], axis=1)                            # (V*C_in, 2*VC)

    # temporal conv weights, BN2 scale folded, block-diagonal over graph nodes,
    # stacked over the kt temporal taps (matches the im2col lane order (dt, w, c)).
    wt = jnp.transpose(p["tcn_w"], (2, 1, 0)) * s2[None, None, :]           # (kt, C_out, C_out)
    wt_big = jnp.einsum("wx,dcf->dwcxf", jnp.eye(V, dtype=f32), wt).reshape(kt * VC, VC)

    # biases / BN shifts, each a (V*C_out,) row broadcast over the n*t rows.
    bg = p["gcn_b"].reshape(K, C_out) * s1[None, :]
    gcn_bias = jnp.einsum("kw,kc->wc", Af.sum(axis=1), bg) + b1[None, :]    # (V, C_out)
    res_bias = jnp.tile(p["res_b"] * sr + brs, V)
    tcn_bias = jnp.tile(p["tcn_b"] * s2 + b2, V)
    biases = jnp.stack([gcn_bias.reshape(-1), res_bias, tcn_bias], axis=0)  # (3, VC)

    # activations: NCHW -> (N, T, V*C_in), lanes ordered (graph node, channel).
    # TODO(synk): at production sizes, emit this layout directly from the previous
    # layer instead of paying the HBM-level transpose here.
    x2 = jnp.transpose(x, (0, 2, 3, 1)).reshape(N, T, V * C_in).astype(f32)

    nb = _pick_block_n(N, T, V * C_in, VC, kt)
    kernel = functools.partial(_stgcn_kernel, Nb=nb, T=T, VC=VC, kt=kt, pad=pad)
    out2 = pl.pallas_call(
        kernel,
        out_shape=jax.ShapeDtypeStruct((N, T, VC), f32),
        grid=(N // nb,),
        in_specs=[
            pl.BlockSpec((nb, T, V * C_in), lambda n: (n, 0, 0)),
            pl.BlockSpec((V * C_in, 2 * VC), lambda n: (0, 0)),
            pl.BlockSpec((kt * VC, VC), lambda n: (0, 0)),
            pl.BlockSpec((3, VC), lambda n: (0, 0)),
        ],
        out_specs=pl.BlockSpec((nb, T, VC), lambda n: (n, 0, 0)),
        compiler_params=pltpu.CompilerParams(dimension_semantics=("parallel",)),
    )(x2, wbig, wt_big, biases)

    out = jnp.transpose(out2.reshape(N, T, V, C_out), (0, 3, 1, 2))         # (N, C_out, T, V)
    return out, A


# -------- pure-JAX reference (mirrors the PyTorch forward) --------
def st_gcn_reference(x, A, p):
    N, C_in, T, V = x.shape
    K = A.shape[0]
    C_out = p["tcn_b"].shape[0]
    kt = p["tcn_w"].shape[-1]
    pad = (kt - 1) // 2

    y = jnp.einsum("oi,nitv->notv", p["gcn_w"], x) + p["gcn_b"][None, :, None, None]
    y = y.reshape(N, K, C_out, T, V)
    z = jnp.einsum("nkctv,kvw->nctw", y, A)

    s1, b1 = _fold_bn(*p["bn1"])
    h = jnp.maximum(z * s1[None, :, None, None] + b1[None, :, None, None], 0.0)
    hp = jnp.pad(h, ((0, 0), (0, 0), (pad, pad), (0, 0)))
    o = jnp.zeros((N, C_out, T, V), jnp.float32) + p["tcn_b"][None, :, None, None]
    for dt in range(kt):
        o = o + jnp.einsum("oc,nctv->notv", p["tcn_w"][:, :, dt], hp[:, :, dt:dt + T, :])
    s2, b2 = _fold_bn(*p["bn2"])
    o = o * s2[None, :, None, None] + b2[None, :, None, None]

    r = jnp.einsum("oi,nitv->notv", p["res_w"], x) + p["res_b"][None, :, None, None]
    sr, br = _fold_bn(*p["bnr"])
    r = r * sr[None, :, None, None] + br[None, :, None, None]
    return jnp.maximum(o + r, 0.0), A


if __name__ == "__main__":
    # Config consistent with st_gcn(in_channels=4, out_channels=16,
    #                               kernel_size=(3, 3), stride=1, residual=True)
    N, C_in, C_out, T, V, K, kt = 2, 4, 16, 8, 16, 3, 3

    key = jax.random.PRNGKey(0)
    ks = jax.random.split(key, 20)
    x = jax.random.normal(ks[0], (N, C_in, T, V), jnp.float32)
    A = jax.random.uniform(ks[1], (K, V, V), jnp.float32)

    def bn_params(k):
        k1, k2, k3, k4 = jax.random.split(k, 4)
        return (1.0 + 0.1 * jax.random.normal(k1, (C_out,), jnp.float32),   # gamma
                0.1 * jax.random.normal(k2, (C_out,), jnp.float32),         # beta
                0.1 * jax.random.normal(k3, (C_out,), jnp.float32),         # running mean
                0.5 + jax.random.uniform(k4, (C_out,), jnp.float32))        # running var

    params = {
        "gcn_w": 0.2 * jax.random.normal(ks[2], (K * C_out, C_in), jnp.float32),
        "gcn_b": 0.1 * jax.random.normal(ks[3], (K * C_out,), jnp.float32),
        "tcn_w": 0.2 * jax.random.normal(ks[4], (C_out, C_out, kt), jnp.float32),
        "tcn_b": 0.1 * jax.random.normal(ks[5], (C_out,), jnp.float32),
        "res_w": 0.2 * jax.random.normal(ks[6], (C_out, C_in), jnp.float32),
        "res_b": 0.1 * jax.random.normal(ks[7], (C_out,), jnp.float32),
        "bn1": bn_params(ks[8]),
        "bn2": bn_params(ks[9]),
        "bnr": bn_params(ks[10]),
    }

    out, A_out = jax.jit(st_gcn_forward)(x, A, params)
    out = jax.block_until_ready(out)

    ref, _ = st_gcn_reference(x, A, params)
    err = float(jnp.max(jnp.abs(out - ref)))
    assert out.shape == (N, C_out, T, V), out.shape
    assert err < 2e-4, f"max abs error {err}"
    print("KERNEL_OK")
</pallas_src>

<mosaic_0001>
module attributes {stable_mosaic.version = 11 : i64} {
  func.func @_stgcn_kernel(%arg0: i32, %arg1: memref<2x8x64xf32, #tpu.memory_space<vmem>>, %arg2: memref<64x512xf32, #tpu.memory_space<vmem>>, %arg3: memref<768x256xf32, #tpu.memory_space<vmem>>, %arg4: memref<3x256xf32, #tpu.memory_space<vmem>>, %arg5: memref<2x8x256xf32, #tpu.memory_space<vmem>>) attributes {dimension_semantics = [#tpu.dimension_semantics<parallel>], iteration_bounds = array<i64: 1>, scalar_prefetch = 0 : i64, scratch_operands = 0 : i64, tpu.core_type = #tpu.core_type<tc>, window_params = [{transform_indices = @transform_0, window_bounds = array<i64: 2, 8, 64>}, {pipeline_mode = #tpu.pipeline_mode<synchronous>, transform_indices = @transform_1, window_bounds = array<i64: 64, 512>}, {pipeline_mode = #tpu.pipeline_mode<synchronous>, transform_indices = @transform_2, window_bounds = array<i64: 768, 256>}, {pipeline_mode = #tpu.pipeline_mode<synchronous>, transform_indices = @transform_3, window_bounds = array<i64: 3, 256>}, {transform_indices = @transform_4, window_bounds = array<i64: 2, 8, 256>}]} {
    %c0 = arith.constant 0 : index
    %c0_0 = arith.constant 0 : index
    %c0_1 = arith.constant 0 : index
    %0 = vector.load %arg1[%c0, %c0_0, %c0_1] : memref<2x8x64xf32, #tpu.memory_space<vmem>>, vector<2x8x64xf32>
    %1 = vector.shape_cast %0 : vector<2x8x64xf32> to vector<16x64xf32>
    %c0_2 = arith.constant 0 : index
    %c0_3 = arith.constant 0 : index
    %2 = vector.load %arg2[%c0_2, %c0_3] : memref<64x512xf32, #tpu.memory_space<vmem>>, vector<64x512xf32>
    %cst = arith.constant dense<0.000000e+00> : vector<16x512xf32>
    %3 = tpu.matmul %1, %2, %cst {dimension_numbers = #tpu.dot_dimension_numbers<[1], [0], [0], [1], [0, 0, 1, 1], [], []>} : vector<16x64xf32>, vector<64x512xf32>, vector<16x512xf32> -> vector<16x512xf32>
    %c0_4 = arith.constant 0 : index
    %c0_5 = arith.constant 0 : index
    %4 = vector.load %arg4[%c0_4, %c0_5] : memref<3x256xf32, #tpu.memory_space<vmem>>, vector<3x256xf32>
    %5 = vector.extract_strided_slice %3 {offsets = [0, 0], sizes = [16, 256], strides = [1, 1]} : vector<16x512xf32> to vector<16x256xf32>
    %6 = vector.extract_strided_slice %4 {offsets = [0, 0], sizes = [1, 256], strides = [1, 1]} : vector<3x256xf32> to vector<1x256xf32>
    %7 = vector.broadcast %6 : vector<1x256xf32> to vector<16x256xf32>
    %8 = arith.addf %5, %7 : vector<16x256xf32>
    %cst_6 = arith.constant 0.000000e+00 : f32
    %9 = vector.broadcast %cst_6 : f32 to vector<16x256xf32>
    %10 = arith.maximumf %8, %9 : vector<16x256xf32>
    %11 = vector.extract_strided_slice %3 {offsets = [0, 256], sizes = [16, 256], strides = [1, 1]} : vector<16x512xf32> to vector<16x256xf32>
    %12 = vector.extract_strided_slice %4 {offsets = [1, 0], sizes = [1, 256], strides = [1, 1]} : vector<3x256xf32> to vector<1x256xf32>
    %13 = vector.broadcast %12 : vector<1x256xf32> to vector<16x256xf32>
    %14 = arith.addf %11, %13 : vector<16x256xf32>
    %15 = vector.shape_cast %10 : vector<16x256xf32> to vector<2x8x256xf32>
    %cst_7 = arith.constant 0.000000e+00 : f32
    %16 = vector.broadcast %cst_7 : f32 to vector<2x1x256xf32>
    %17 = tpu.concatenate %16, %15, %16 in 1 : vector<2x1x256xf32>, vector<2x8x256xf32>, vector<2x1x256xf32> -> vector<2x10x256xf32>
    %18 = vector.extract_strided_slice %17 {offsets = [0, 0, 0], sizes = [2, 8, 256], strides = [1, 1, 1]} : vector<2x10x256xf32> to vector<2x8x256xf32>
    %19 = vector.extract_strided_slice %17 {offsets = [0, 1, 0], sizes = [2, 8, 256], strides = [1, 1, 1]} : vector<2x10x256xf32> to vector<2x8x256xf32>
    %20 = vector.extract_strided_slice %17 {offsets = [0, 2, 0], sizes = [2, 8, 256], strides = [1, 1, 1]} : vector<2x10x256xf32> to vector<2x8x256xf32>
    %21 = tpu.concatenate %18, %19, %20 in 2 : vector<2x8x256xf32>, vector<2x8x256xf32>, vector<2x8x256xf32> -> vector<2x8x768xf32>
    %22 = vector.shape_cast %21 : vector<2x8x768xf32> to vector<16x768xf32>
    %c0_8 = arith.constant 0 : index
    %c0_9 = arith.constant 0 : index
    %23 = vector.load %arg3[%c0_8, %c0_9] : memref<768x256xf32, #tpu.memory_space<vmem>>, vector<768x256xf32>
    %cst_10 = arith.constant dense<0.000000e+00> : vector<16x256xf32>
    %24 = tpu.matmul %22, %23, %cst_10 {dimension_numbers = #tpu.dot_dimension_numbers<[1], [0], [0], [1], [0, 0, 1, 1], [], []>} : vector<16x768xf32>, vector<768x256xf32>, vector<16x256xf32> -> vector<16x256xf32>
    %25 = vector.extract_strided_slice %4 {offsets = [2, 0], sizes = [1, 256], strides = [1, 1]} : vector<3x256xf32> to vector<1x256xf32>
    %26 = vector.broadcast %25 : vector<1x256xf32> to vector<16x256xf32>
    %27 = arith.addf %24, %26 : vector<16x256xf32>
    %28 = arith.addf %27, %14 : vector<16x256xf32>
    %cst_11 = arith.constant 0.000000e+00 : f32
    %29 = vector.broadcast %cst_11 : f32 to vector<16x256xf32>
    %30 = arith.maximumf %28, %29 : vector<16x256xf32>
    %31 = vector.shape_cast %30 : vector<16x256xf32> to vector<2x8x256xf32>
    %c0_12 = arith.constant 0 : index
    %c0_13 = arith.constant 0 : index
    %c0_14 = arith.constant 0 : index
    %32 = vector.load %arg5[%c0_12, %c0_13, %c0_14] : memref<2x8x256xf32, #tpu.memory_space<vmem>>, vector<2x8x256xf32>
    tpu.vector_store %arg5[%c0_12, %c0_13, %c0_14], %31 {strides = array<i32>} : memref<2x8x256xf32, #tpu.memory_space<vmem>>, vector<2x8x256xf32>,
    return
  }
  func.func @transform_0(%arg0: i32) -> (i32, i32, i32) {
    %c0_i32 = arith.constant 0 : i32
    %c0_i32_0 = arith.constant 0 : i32
    %c0_i32_1 = arith.constant 0 : i32
    return %arg0, %c0_i32, %c0_i32_0 : i32, i32, i32
  }
  func.func @transform_1(%arg0: i32) -> (i32, i32) {
    %c0_i32 = arith.constant 0 : i32
    %c0_i32_0 = arith.constant 0 : i32
    %c0_i32_1 = arith.constant 0 : i32
    return %c0_i32, %c0_i32_0 : i32, i32
  }
  func.func @transform_2(%arg0: i32) -> (i32, i32) {
    %c0_i32 = arith.constant 0 : i32
    %c0_i32_0 = arith.constant 0 : i32
    %c0_i32_1 = arith.constant 0 : i32
    return %c0_i32, %c0_i32_0 : i32, i32
  }
  func.func @transform_3(%arg0: i32) -> (i32, i32) {
    %c0_i32 = arith.constant 0 : i32
    %c0_i32_0 = arith.constant 0 : i32
    %c0_i32_1 = arith.constant 0 : i32
    return %c0_i32, %c0_i32_0 : i32, i32
  }
  func.func @transform_4(%arg0: i32) -> (i32, i32, i32) {
    %c0_i32 = arith.constant 0 : i32
    %c0_i32_0 = arith.constant 0 : i32
    %c0_i32_1 = arith.constant 0 : i32
    return %arg0, %c0_i32, %c0_i32_0 : i32, i32, i32
  }
}

</mosaic_0001>

<llo_original>
// kernel: tile.13
$region0: #{tile.13}
  #allocation0 [shape = 's32[1]{0}', space=sflag, size = 0x4, scoped, tag = 'scoped memory for tile.13']
  %s0 = inlined_call_operand.vmem [shape: f32[16], index: 0, kind: input, shape index: {}]
  %s1 = inlined_call_operand.vmem [shape: f32[16,16], index: 1, kind: output, shape index: {}]
  // Predicated region
  $region2: #{tile.13} parent=0 // pred_check
    _
  $region3: #{tile.13} parent=0 // pred_check_branch
    %3 = sbr.rel (0) target = $region5
  $region4: #{tile.13} parent=0 // pred_region
    _
  $region5: #{tile.13} parent=0 // pred_fallthru
    _
  %v4 = vld [vmem:[%s0] ss:$0 sm:$0xff]
  %5 = vst [vmem:[%s1] sm:$0xff] %v4
  %s6 = scalar_lea.vmem %s1, 8
  %7 = vst [vmem:[%s6] sm:$0xff] %v4

// kernel: st_gcn_forward.1
$region0: #{st_gcn_forward.1}
  #allocation0 [shape = 'u32[]', space=smem, size = 0x4, offset = 0x4, fixed_abs, tag = 'smem constant byte address 0x4 - core index']
  #allocation1 [shape = 'u32[144,128]{1,0:T(1,128)}', space=vmem, size = 0x12000, scoped, tag = 'internal scratch']
  %s0 = inlined_call_operand.vmem [shape: f32[2,8,64], index: 0, kind: input, shape index: {}]
  %s1 = inlined_call_operand.vmem [shape: f32[64,512], index: 1, kind: input, shape index: {}]
  %s2 = inlined_call_operand.vmem [shape: f32[768,256], index: 2, kind: input, shape index: {}]
  %s3 = inlined_call_operand.vmem [shape: f32[3,256], index: 3, kind: input, shape index: {}]
  %s4 = inlined_call_operand.vmem [shape: f32[2,8,256], index: 4, kind: output, shape index: {}]
  %s5 = sld [smem:[#allocation0]]
  $region26: #{st_gcn_forward.1} parent=0
    _
  %s7 = ssub.s32 1, %s5
  %s8 = scalar_select 0, %s7, %s5
  // Predicated region
  $region2: #{st_gcn_forward.1} parent=0 // pred_check
    _
  $region3: #{st_gcn_forward.1} parent=0 // pred_check_branch
    %10 = sbr.rel (0) target = $region5
  $region4: #{st_gcn_forward.1} parent=0 // pred_region
    _
  $region5: #{st_gcn_forward.1} parent=0 // pred_fallthru
    _
  // Predicated region
  $region6: #{st_gcn_forward.1} parent=0 // pred_check
    _
  $region7: #{st_gcn_forward.1} parent=0 // pred_check_branch
    %12 = sbr.rel (0) target = $region9
  $region8: #{st_gcn_forward.1} parent=0 // pred_region
    _
  $region9: #{st_gcn_forward.1} parent=0 // pred_fallthru
    _
  // Predicated region
  $region10: #{st_gcn_forward.1} parent=0 // pred_check
    _
  $region11: #{st_gcn_forward.1} parent=0 // pred_check_branch
    %14 = sbr.rel (0) target = $region13
  $region12: #{st_gcn_forward.1} parent=0 // pred_region
    _
  $region13: #{st_gcn_forward.1} parent=0 // pred_fallthru
    _
  // Predicated region
  $region14: #{st_gcn_forward.1} parent=0 // pred_check
    _
  $region15: #{st_gcn_forward.1} parent=0 // pred_check_branch
    %16 = sbr.rel (0) target = $region17
  $region16: #{st_gcn_forward.1} parent=0 // pred_region
    _
  $region17: #{st_gcn_forward.1} parent=0 // pred_fallthru
    _
  %v17 = vld [vmem:[%s0] sm:$0xff]
  %v18 = vld [vmem:[%s0 + $0x8] sm:$0xff]
  %v19 = vld [vmem:[%s1] sm:$0xff]
  %v20 = vld [vmem:[%s1 + $0x8] sm:$0xff]
  %v21 = vld [vmem:[%s1 + $0x10] sm:$0xff]
  %v22 = vld [vmem:[%s1 + $0x18] sm:$0xff]
  %v23 = vld [vmem:[%s1 + $0x20] sm:$0xff]
  %v24 = vld [vmem:[%s1 + $0x28] sm:$0xff]
  %v25 = vld [vmem:[%s1 + $0x30] sm:$0xff]
  %v26 = vld [vmem:[%s1 + $0x38] sm:$0xff]
  %v27 = vld [vmem:[%s1 + $0x40] sm:$0xff]
  %v28 = vld [vmem:[%s1 + $0x48] sm:$0xff]
  %v29 = vld [vmem:[%s1 + $0x50] sm:$0xff]
  %v30 = vld [vmem:[%s1 + $0x58] sm:$0xff]
  %v31 = vld [vmem:[%s1 + $0x60] sm:$0xff]
  %v32 = vld [vmem:[%s1 + $0x68] sm:$0xff]
  %v33 = vld [vmem:[%s1 + $0x70] sm:$0xff]
  %v34 = vld [vmem:[%s1 + $0x78] sm:$0xff]
  %v35 = vld [vmem:[%s1 + $0x80] sm:$0xff]
  %v36 = vld [vmem:[%s1 + $0x88] sm:$0xff]
  %v37 = vld [vmem:[%s1 + $0x90] sm:$0xff]
  %v38 = vld [vmem:[%s1 + $0x98] sm:$0xff]
  %v39 = vld [vmem:[%s1 + $0xa0] sm:$0xff]
  %v40 = vld [vmem:[%s1 + $0xa8] sm:$0xff]
  %v41 = vld [vmem:[%s1 + $0xb0] sm:$0xff]
  %v42 = vld [vmem:[%s1 + $0xb8] sm:$0xff]
  %v43 = vld [vmem:[%s1 + $0xc0] sm:$0xff]
  %v44 = vld [vmem:[%s1 + $0xc8] sm:$0xff]
  %v45 = vld [vmem:[%s1 + $0xd0] sm:$0xff]
  %v46 = vld [vmem:[%s1 + $0xd8] sm:$0xff]
  %v47 = vld [vmem:[%s1 + $0xe0] sm:$0xff]
  %v48 = vld [vmem:[%s1 + $0xe8] sm:$0xff]
  %v49 = vld [vmem:[%s1 + $0xf0] sm:$0xff]
  %v50 = vld [vmem:[%s1 + $0xf8] sm:$0xff]
  %vm51 = vcmask 523264
  %v53 = vsel %vm51, %v17, 0
  %v56 = vsel %vm51, %v18, 0
  %58 = vmatprep.subr.mxu0 %v20
  %59 = vmatpush1.msra.mxu0 %v19
  %60 = vmatprep.subr.mxu0 %v24
  %61 = vmatpush1.msra.mxu0 %v23
  %62 = vmatprep.subr.mxu0 %v28
  %63 = vmatpush1.msra.mxu0 %v27
  %64 = vmatprep.subr.mxu0 %v32
  %65 = vmatpush1.msra.mxu0 %v31
  %66 = vmatprep.subr.mxu0 %v36
  %67 = vmatpush1.msra.mxu0 %v35
  %68 = vmatprep.subr.mxu0 %v40
  %69 = vmatpush1.msra.mxu0 %v39
  %70 = vmatprep.subr.mxu0 %v44
  %71 = vmatpush1.msra.mxu0 %v43
  %72 = vmatprep.subr.mxu0 %v48
  %73 = vmatpush1.msra.mxu0 %v47
  %74 = vmatprep.subr.mxu0 0.0
  %75 = vmatpush1.msra.mxu0 0.0
  %76 = vmatprep.subr.mxu0 0.0
  %77 = vmatpush1.msra.mxu0 0.0
  %78 = vmatprep.subr.mxu0 0.0
  %79 = vmatpush1.msra.mxu0 0.0
  %80 = vmatprep.subr.mxu0 0.0
  %81 = vmatpush1.msra.mxu0 0.0
  %82 = vmatprep.subr.mxu0 0.0
  %83 = vmatpush1.msra.mxu0 0.0
  %84 = vmatprep.subr.mxu0 0.0
  %85 = vmatpush1.msra.mxu0 0.0
  %86 = vmatprep.subr.mxu0 0.0
  %87 = vmatpush1.msra.mxu0 0.0
  %88 = vmatprep.subr.mxu0 0.0
  %89 = vmatpush1.msra.mxu0 0.0
  %90 = vmatprep.subr.mxu0 0.0
  %91 = vmatpush1.msra.mxu0 0.0
  %92 = vmatprep.subr.mxu0 0.0
  %93 = vmatpush1.msra.mxu0 0.0
  %94 = vmatprep.subr.mxu0 0.0
  %95 = vmatpush1.msra.mxu0 0.0
  %96 = vmatprep.subr.mxu0 0.0
  %97 = vmatpush1.msra.mxu0 0.0
  %98 = vmatprep.subr.mxu0 0.0
  %99 = vmatpush1.msra.mxu0 0.0
  %100 = vmatprep.subr.mxu0 0.0
  %101 = vmatpush1.msra.mxu0 0.0
  %102 = vmatprep.subr.mxu0 0.0
  %103 = vmatpush1.msra.mxu0 0.0
  %104 = vmatprep.subr.mxu0 0.0
  %105 = vmatpush1.msra.mxu0 0.0
  %106 = vmatprep.subr.mxu0 0.0
  %107 = vmatpush1.msra.mxu0 0.0
  %108 = vmatprep.subr.mxu0 0.0
  %109 = vmatpush1.msra.mxu0 0.0
  %110 = vmatprep.subr.mxu0 0.0
  %111 = vmatpush1.msra.mxu0 0.0
  %112 = vmatprep.subr.mxu0 0.0
  %113 = vmatpush1.msra.mxu0 0.0
  %114 = vmatprep.subr.mxu0 0.0
  %115 = vmatpush1.msra.mxu0 0.0
  %116 = vmatprep.subr.mxu0 0.0
  %117 = vmatpush1.msra.mxu0 0.0
  %118 = vmatprep.subr.mxu0 0.0
  %119 = vmatpush1.msra.mxu0 0.0
  %120 = vmatprep.subr.mxu0 0.0
  %121 = vmatpush1.msra.mxu0 0.0
  %122 = vmatprep.mubr.f32.mxu0 0.0
  %123 = vmatmul.mubr.f32.gmra.mrb[0].mxu0 %v53
  %v124 = vpop.f32.mrb[0].mxu0
  %v125 = vadd.f32 0.0, %v124
  %v126 = vpop.f32.mrb[0].mxu0
  %v127 = vadd.f32 0.0, %v126
  %128 = vmatprep.mubr.f32.mxu0 0.0
  %129 = vmatmul.mubr.f32.gmra.mrb[0].mxu0 %v56
  %v130 = vpop.f32.mrb[0].mxu0
  %v131 = vadd.f32 0.0, %v130
  %v132 = vpop.f32.mrb[0].mxu0
  %v133 = vadd.f32 0.0, %v132
  %134 = vdwg.mxu0
  %135 = vmatprep.subr.mxu0 %v22
  %136 = vmatpush1.msra.mxu0 %v21
  %137 = vmatprep.subr.mxu0 %v26
  %138 = vmatpush1.msra.mxu0 %v25
  %139 = vmatprep.subr.mxu0 %v30
  %140 = vmatpush1.msra.mxu0 %v29
  %141 = vmatprep.subr.mxu0 %v34
  %142 = vmatpush1.msra.mxu0 %v33
  %143 = vmatprep.subr.mxu0 %v38
  %144 = vmatpush1.msra.mxu0 %v37
  %145 = vmatprep.subr.mxu0 %v42
  %146 = vmatpush1.msra.mxu0 %v41
  %147 = vmatprep.subr.mxu0 %v46
  %148 = vmatpush1.msra.mxu0 %v45
  %149 = vmatprep.subr.mxu0 %v50
  %150 = vmatpush1.msra.mxu0 %v49
  %151 = vmatprep.subr.mxu0 0.0
  %152 = vmatpush1.msra.mxu0 0.0
  %153 = vmatprep.subr.mxu0 0.0
  %154 = vmatpush1.msra.mxu0 0.0
  %155 = vmatprep.subr.mxu0 0.0
  %156 = vmatpush1.msra.mxu0 0.0
  %157 = vmatprep.subr.mxu0 0.0
  %158 = vmatpush1.msra.mxu0 0.0
  %159 = vmatprep.subr.mxu0 0.0
  %160 = vmatpush1.msra.mxu0 0.0
  %161 = vmatprep.subr.mxu0 0.0
  %162 = vmatpush1.msra.mxu0 0.0
  %163 = vmatprep.subr.mxu0 0.0
  %164 = vmatpush1.msra.mxu0 0.0
  %165 = vmatprep.subr.mxu0 0.0
  %166 = vmatpush1.msra.mxu0 0.0
  %167 = vmatprep.subr.mxu0 0.0
  %168 = vmatpush1.msra.mxu0 0.0
  %169 = vmatprep.subr.mxu0 0.0
  %170 = vmatpush1.msra.mxu0 0.0
  %171 = vmatprep.subr.mxu0 0.0
  %172 = vmatpush1.msra.mxu0 0.0
  %173 = vmatprep.subr.mxu0 0.0
  %174 = vmatpush1.msra.mxu0 0.0
  %175 = vmatprep.subr.mxu0 0.0
  %176 = vmatpush1.msra.mxu0 0.0
  %177 = vmatprep.subr.mxu0 0.0
  %178 = vmatpush1.msra.mxu0 0.0
  %179 = vmatprep.subr.mxu0 0.0
  %180 = vmatpush1.msra.mxu0 0.0
  %181 = vmatprep.subr.mxu0 0.0
  %182 = vmatpush1.msra.mxu0 0.0
  %183 = vmatprep.subr.mxu0 0.0
  %184 = vmatpush1.msra.mxu0 0.0
  %185 = vmatprep.subr.mxu0 0.0
  %186 = vmatpush1.msra.mxu0 0.0
  %187 = vmatprep.subr.mxu0 0.0
  %188 = vmatpush1.msra.mxu0 0.0
  %189 = vmatprep.subr.mxu0 0.0
  %190 = vmatpush1.msra.mxu0 0.0
  %191 = vmatprep.subr.mxu0 0.0
  %192 = vmatpush1.msra.mxu0 0.0
  %193 = vmatprep.subr.mxu0 0.0
  %194 = vmatpush1.msra.mxu0 0.0
  %195 = vmatprep.subr.mxu0 0.0
  %196 = vmatpush1.msra.mxu0 0.0
  %197 = vmatprep.subr.mxu0 0.0
  %198 = vmatpush1.msra.mxu0 0.0
  %199 = vmatprep.mubr.f32.mxu0 0.0
  %200 = vmatmul.mubr.f32.gmra.mrb[0].mxu0 %v53
  %v201 = vpop.f32.mrb[0].mxu0
  %v202 = vadd.f32 0.0, %v201
  %v203 = vpop.f32.mrb[0].mxu0
  %v204 = vadd.f32 0.0, %v203
  %205 = vmatprep.mubr.f32.mxu0 0.0
  %206 = vmatmul.mubr.f32.gmra.mrb[0].mxu0 %v56
  %v207 = vpop.f32.mrb[0].mxu0
  %v208 = vadd.f32 0.0, %v207
  %v209 = vpop.f32.mrb[0].mxu0
  %v210 = vadd.f32 0.0, %v209
  %211 = vdwg.mxu0
  %v212 = vld [vmem:[%s3] sm:$0x77]
  %v214 = vlaneseq
  %v215 = vshrl.u32 %v214, 7
  %v216 = vsub.s32 0, %v215
  %v217 = vrot.slane %v212, %v216
  %v218 = vlaneseq
  %v219 = vshrl.u32 %v218, 7
  %v220 = vsub.s32 4, %v219
  %v221 = vrot.slane %v212, %v220
  %v224 = vlaneseq
  %v225 = vshrl.u32 %v224, 7
  %v226 = vsub.s32 0, %v225
  %v227 = vrot.slane %v217, %v226
  %v228 = vlaneseq
  %v229 = vshrl.u32 %v228, 7
  %v230 = vsub.s32 0, %v229
  %v231 = vrot.slane %v221, %v230
  %v232 = vadd.f32 %v125, %v227
  %v233 = vadd.f32 %v127, %v231
  %v234 = vadd.f32 %v131, %v227
  %v235 = vadd.f32 %v133, %v231
  %v236 = vmax.f32 %v232, 0.0
  %v237 = vmax.f32 %v233, 0.0
  %v238 = vmax.f32 %v234, 0.0
  %v239 = vmax.f32 %v235, 0.0
  %v240 = vlaneseq
  %v241 = vshrl.u32 %v240, 7
  %v242 = vsub.s32 1, %v241
  %v243 = vrot.slane %v212, %v242
  %v244 = vlaneseq
  %v245 = vshrl.u32 %v244, 7
  %v246 = vsub.s32 5, %v245
  %v247 = vrot.slane %v212, %v246
  %v250 = vlaneseq
  %v251 = vshrl.u32 %v250, 7
  %v252 = vsub.s32 1, %v251
  %v253 = vrot.slane %v243, %v252
  %v254 = vlaneseq
  %v255 = vshrl.u32 %v254, 7
  %v256 = vsub.s32 1, %v255
  %v257 = vrot.slane %v247, %v256
  %v258 = vadd.f32 %v202, %v253
  %v259 = vadd.f32 %v204, %v257
  %v260 = vadd.f32 %v208, %v253
  %v261 = vadd.f32 %v210, %v257
  %v266 = vrot.slane %v236, 7
  %v267 = vrot.slane %v237, 7
  %v268 = vrot.slane %v238, 7
  %v269 = vrot.slane %v239, 7
  %vm274 = vcmask 1040384
  %v275 = vsel %vm274, 0.0, %v266
  %v276 = vsel %vm274, 0.0, %v267
  %v277 = vsel %vm274, 0.0, %v268
  %v278 = vsel %vm274, 0.0, %v269
  %v279 = vsel %vm274, %v266, 0.0
  %v280 = vsel %vm274, %v267, 0.0
  %v281 = vsel %vm274, %v268, 0.0
  %v282 = vsel %vm274, %v269, 0.0
  %vm291 = vcmask 1046528
  %v292 = vrot.slane %v275, 1
  %v293 = vrot.slane %v279, 1
  %v294 = vsel %vm291, %v292, %v293
  %v295 = vrot.slane %v276, 1
  %v296 = vrot.slane %v280, 1
  %v297 = vsel %vm291, %v295, %v296
  %v298 = vrot.slane %v277, 1
  %v299 = vrot.slane %v281, 1
  %v300 = vsel %vm291, %v298, %v299
  %v301 = vrot.slane %v278, 1
  %v302 = vrot.slane %v282, 1
  %v303 = vsel %vm291, %v301, %v302
  %vm308 = vcmask 1045504
  %v309 = vrot.slane %v275, 2
  %v310 = vrot.slane %v279, 2
  %v311 = vsel %vm308, %v309, %v310
  %v312 = vrot.slane %v276, 2
  %v313 = vrot.slane %v280, 2
  %v314 = vsel %vm308, %v312, %v313
  %v315 = vrot.slane %v277, 2
  %v316 = vrot.slane %v281, 2
  %v317 = vsel %vm308, %v315, %v316
  %v318 = vrot.slane %v278, 2
  %v319 = vrot.slane %v282, 2
  %v320 = vsel %vm308, %v318, %v319
  %v325 = vld [vmem:[%s2] sm:$0xff]
  %v326 = vld [vmem:[%s2 + $0x8] sm:$0xff]
  %v327 = vld [vmem:[%s2 + $0x10] sm:$0xff]
  %v328 = vld [vmem:[%s2 + $0x18] sm:$0xff]
  %v329 = vld [vmem:[%s2 + $0x20] sm:$0xff]
  %v330 = vld [vmem:[%s2 + $0x28] sm:$0xff]
  %v331 = vld [vmem:[%s2 + $0x30] sm:$0xff]
  %v332 = vld [vmem:[%s2 + $0x38] sm:$0xff]
  %v333 = vld [vmem:[%s2 + $0x40] sm:$0xff]
  %v334 = vld [vmem:[%s2 + $0x48] sm:$0xff]
  %v335 = vld [vmem:[%s2 + $0x50] sm:$0xff]
  %v336 = vld [vmem:[%s2 + $0x58] sm:$0xff]
  %v337 = vld [vmem:[%s2 + $0x60] sm:$0xff]
  %v338 = vld [vmem:[%s2 + $0x68] sm:$0xff]
  %v339 = vld [vmem:[%s2 + $0x70] sm:$0xff]
  %v340 = vld [vmem:[%s2 + $0x78] sm:$0xff]
  %v341 = vld [vmem:[%s2 + $0x80] sm:$0xff]
  %v342 = vld [vmem:[%s2 + $0x88] sm:$0xff]
  %v343 = vld [vmem:[%s2 + $0x90] sm:$0xff]
  %v344 = vld [vmem:[%s2 + $0x98] sm:$0xff]
  %v345 = vld [vmem:[%s2 + $0xa0] sm:$0xff]
  %v346 = vld [vmem:[%s2 + $0xa8] sm:$0xff]
  %v347 = vld [vmem:[%s2 + $0xb0] sm:$0xff]
  %v348 = vld [vmem:[%s2 + $0xb8] sm:$0xff]
  %v349 = vld [vmem:[%s2 + $0xc0] sm:$0xff]
  %v350 = vld [vmem:[%s2 + $0xc8] sm:$0xff]
  %v351 = vld [vmem:[%s2 + $0xd0] sm:$0xff]
  %v352 = vld [vmem:[%s2 + $0xd8] sm:$0xff]
  %v353 = vld [vmem:[%s2 + $0xe0] sm:$0xff]
  %v354 = vld [vmem:[%s2 + $0xe8] sm:$0xff]
  %v355 = vld [vmem:[%s2 + $0xf0] sm:$0xff]
  %v356 = vld [vmem:[%s2 + $0xf8] sm:$0xff]
  %v357 = vld [vmem:[%s2 + $0x100] sm:$0xff]
  %v358 = vld [vmem:[%s2 + $0x108] sm:$0xff]
  %v359 = vld [vmem:[%s2 + $0x110] sm:$0xff]
  %v360 = vld [vmem:[%s2 + $0x118] sm:$0xff]
  %v361 = vld [vmem:[%s2 + $0x120] sm:$0xff]
  %v362 = vld [vmem:[%s2 + $0x128] sm:$0xff]
  %v363 = vld [vmem:[%s2 + $0x130] sm:$0xff]
  %v364 = vld [vmem:[%s2 + $0x138] sm:$0xff]
  %v365 = vld [vmem:[%s2 + $0x140] sm:$0xff]
  %v366 = vld [vmem:[%s2 + $0x148] sm:$0xff]
  %v367 = vld [vmem:[%s2 + $0x150] sm:$0xff]
  %v368 = vld [vmem:[%s2 + $0x158] sm:$0xff]
  %v369 = vld [vmem:[%s2 + $0x160] sm:$0xff]
  %v370 = vld [vmem:[%s2 + $0x168] sm:$0xff]
  %v371 = vld [vmem:[%s2 + $0x170] sm:$0xff]
  %v372 = vld [vmem:[%s2 + $0x178] sm:$0xff]
  %v373 = vld [vmem:[%s2 + $0x180] sm:$0xff]
  %v374 = vld [vmem:[%s2 + $0x188] sm:$0xff]
  %v375 = vld [vmem:[%s2 + $0x190] sm:$0xff]
  %v376 = vld [vmem:[%s2 + $0x198] sm:$0xff]
  %v377 = vld [vmem:[%s2 + $0x1a0] sm:$0xff]
  %v378 = vld [vmem:[%s2 + $0x1a8] sm:$0xff]
  %v379 = vld [vmem:[%s2 + $0x1b0] sm:$0xff]
  %v380 = vld [vmem:[%s2 + $0x1b8] sm:$0xff]
  %v381 = vld [vmem:[%s2 + $0x1c0] sm:$0xff]
  %v382 = vld [vmem:[%s2 + $0x1c8] sm:$0xff]
  %v383 = vld [vmem:[%s2 + $0x1d0] sm:$0xff]
  %v384 = vld [vmem:[%s2 + $0x1d8] sm:$0xff]
  %v385 = vld [vmem:[%s2 + $0x1e0] sm:$0xff]
  %v386 = vld [vmem:[%s2 + $0x1e8] sm:$0xff]
  %v387 = vld [vmem:[%s2 + $0x1f0] sm:$0xff]
  %v388 = vld [vmem:[%s2 + $0x1f8] sm:$0xff]
  %v389 = vld [vmem:[%s2 + $0x200] sm:$0xff]
  %v390 = vld [vmem:[%s2 + $0x208] sm:$0xff]
  %v391 = vld [vmem:[%s2 + $0x210] sm:$0xff]
  %v392 = vld [vmem:[%s2 + $0x218] sm:$0xff]
  %v393 = vld [vmem:[%s2 + $0x220] sm:$0xff]
  %v394 = vld [vmem:[%s2 + $0x228] sm:$0xff]
  %v395 = vld [vmem:[%s2 + $0x230] sm:$0xff]
  %v396 = vld [vmem:[%s2 + $0x238] sm:$0xff]
  %v397 = vld [vmem:[%s2 + $0x240] sm:$0xff]
  %v398 = vld [vmem:[%s2 + $0x248] sm:$0xff]
  %v399 = vld [vmem:[%s2 + $0x250] sm:$0xff]
  %v400 = vld [vmem:[%s2 + $0x258] sm:$0xff]
  %v401 = vld [vmem:[%s2 + $0x260] sm:$0xff]
  %v402 = vld [vmem:[%s2 + $0x268] sm:$0xff]
  %v403 = vld [vmem:[%s2 + $0x270] sm:$0xff]
  %v404 = vld [vmem:[%s2 + $0x278] sm:$0xff]
  %v405 = vld [vmem:[%s2 + $0x280] sm:$0xff]
  %v406 = vld [vmem:[%s2 + $0x288] sm:$0xff]
  %v407 = vld [vmem:[%s2 + $0x290] sm:$0xff]
  %v408 = vld [vmem:[%s2 + $0x298] sm:$0xff]
  %v409 = vld [vmem:[%s2 + $0x2a0] sm:$0xff]
  %v410 = vld [vmem:[%s2 + $0x2a8] sm:$0xff]
  %v411 = vld [vmem:[%s2 + $0x2b0] sm:$0xff]
  %v412 = vld [vmem:[%s2 + $0x2b8] sm:$0xff]
  %v413 = vld [vmem:[%s2 + $0x2c0] sm:$0xff]
  %v414 = vld [vmem:[%s2 + $0x2c8] sm:$0xff]
  %v415 = vld [vmem:[%s2 + $0x2d0] sm:$0xff]
  %v416 = vld [vmem:[%s2 + $0x2d8] sm:$0xff]
  %v417 = vld [vmem:[%s2 + $0x2e0] sm:$0xff]
  %v418 = vld [vmem:[%s2 + $0x2e8] sm:$0xff]
  %v419 = vld [vmem:[%s2 + $0x2f0] sm:$0xff]
  %v420 = vld [vmem:[%s2 + $0x2f8] sm:$0xff]
  %v421 = vld [vmem:[%s2 + $0x300] sm:$0xff]
  %v422 = vld [vmem:[%s2 + $0x308] sm:$0xff]
  %v423 = vld [vmem:[%s2 + $0x310] sm:$0xff]
  %v424 = vld [vmem:[%s2 + $0x318] sm:$0xff]
  %v425 = vld [vmem:[%s2 + $0x320] sm:$0xff]
  %v426 = vld [vmem:[%s2 + $0x328] sm:$0xff]
  %v427 = vld [vmem:[%s2 + $0x330] sm:$0xff]
  %v428 = vld [vmem:[%s2 + $0x338] sm:$0xff]
  %v429 = vld [vmem:[%s2 + $0x340] sm:$0xff]
  %v430 = vld [vmem:[%s2 + $0x348] sm:$0xff]
  %v431 = vld [vmem:[%s2 + $0x350] sm:$0xff]
  %v432 = vld [vmem:[%s2 + $0x358] sm:$0xff]
  %v433 = vld [vmem:[%s2 + $0x360] sm:$0xff]
  %v434 = vld [vmem:[%s2 + $0x368] sm:$0xff]
  %v435 = vld [vmem:[%s2 + $0x370] sm:$0xff]
  %v436 = vld [vmem:[%s2 + $0x378] sm:$0xff]
  %v437 = vld [vmem:[%s2 + $0x380] sm:$0xff]
  %v438 = vld [vmem:[%s2 + $0x388] sm:$0xff]
  %v439 = vld [vmem:[%s2 + $0x390] sm:$0xff]
  %v440 = vld [vmem:[%s2 + $0x398] sm:$0xff]
  %v441 = vld [vmem:[%s2 + $0x3a0] sm:$0xff]
  %v442 = vld [vmem:[%s2 + $0x3a8] sm:$0xff]
  %v443 = vld [vmem:[%s2 + $0x3b0] sm:$0xff]
  %v444 = vld [vmem:[%s2 + $0x3b8] sm:$0xff]
  %v445 = vld [vmem:[%s2 + $0x3c0] sm:$0xff]
  %v446 = vld [vmem:[%s2 + $0x3c8] sm:$0xff]
  %v447 = vld [vmem:[%s2 + $0x3d0] sm:$0xff]
  %v448 = vld [vmem:[%s2 + $0x3d8] sm:$0xff]
  %v449 = vld [vmem:[%s2 + $0x3e0] sm:$0xff]
  %v450 = vld [vmem:[%s2 + $0x3e8] sm:$0xff]
  %v451 = vld [vmem:[%s2 + $0x3f0] sm:$0xff]
  %v452 = vld [vmem:[%s2 + $0x3f8] sm:$0xff]
  %v453 = vld [vmem:[%s2 + $0x400] sm:$0xff]
  %v454 = vld [vmem:[%s2 + $0x408] sm:$0xff]
  %v455 = vld [vmem:[%s2 + $0x410] sm:$0xff]
  %v456 = vld [vmem:[%s2 + $0x418] sm:$0xff]
  %v457 = vld [vmem:[%s2 + $0x420] sm:$0xff]
  %v458 = vld [vmem:[%s2 + $0x428] sm:$0xff]
  %v459 = vld [vmem:[%s2 + $0x430] sm:$0xff]
  %v460 = vld [vmem:[%s2 + $0x438] sm:$0xff]
  %v461 = vld [vmem:[%s2 + $0x440] sm:$0xff]
  %v462 = vld [vmem:[%s2 + $0x448] sm:$0xff]
  %v463 = vld [vmem:[%s2 + $0x450] sm:$0xff]
  %v464 = vld [vmem:[%s2 + $0x458] sm:$0xff]
  %v465 = vld [vmem:[%s2 + $0x460] sm:$0xff]
  %v466 = vld [vmem:[%s2 + $0x468] sm:$0xff]
  %v467 = vld [vmem:[%s2 + $0x470] sm:$0xff]
  %v468 = vld [vmem:[%s2 + $0x478] sm:$0xff]
  %v469 = vld [vmem:[%s2 + $0x480] sm:$0xff]
  %v470 = vld [vmem:[%s2 + $0x488] sm:$0xff]
  %v471 = vld [vmem:[%s2 + $0x490] sm:$0xff]
  %v472 = vld [vmem:[%s2 + $0x498] sm:$0xff]
  %v473 = vld [vmem:[%s2 + $0x4a0] sm:$0xff]
  %v474 = vld [vmem:[%s2 + $0x4a8] sm:$0xff]
  %v475 = vld [vmem:[%s2 + $0x4b0] sm:$0xff]
  %v476 = vld [vmem:[%s2 + $0x4b8] sm:$0xff]
  %v477 = vld [vmem:[%s2 + $0x4c0] sm:$0xff]
  %v478 = vld [vmem:[%s2 + $0x4c8] sm:$0xff]
  %v479 = vld [vmem:[%s2 + $0x4d0] sm:$0xff]
  %v480 = vld [vmem:[%s2 + $0x4d8] sm:$0xff]
  %v481 = vld [vmem:[%s2 + $0x4e0] sm:$0xff]
  %v482 = vld [vmem:[%s2 + $0x4e8] sm:$0xff]
  %v483 = vld [vmem:[%s2 + $0x4f0] sm:$0xff]
  %v484 = vld [vmem:[%s2 + $0x4f8] sm:$0xff]
  %v485 = vld [vmem:[%s2 + $0x500] sm:$0xff]
  %v486 = vld [vmem:[%s2 + $0x508] sm:$0xff]
  %v487 = vld [vmem:[%s2 + $0x510] sm:$0xff]
  %v488 = vld [vmem:[%s2 + $0x518] sm:$0xff]
  %v489 = vld [vmem:[%s2 + $0x520] sm:$0xff]
  %v490 = vld [vmem:[%s2 + $0x528] sm:$0xff]
  %v491 = vld [vmem:[%s2 + $0x530] sm:$0xff]
  %v492 = vld [vmem:[%s2 + $0x538] sm:$0xff]
  %v493 = vld [vmem:[%s2 + $0x540] sm:$0xff]
  %v494 = vld [vmem:[%s2 + $0x548] sm:$0xff]
  %v495 = vld [vmem:[%s2 + $0x550] sm:$0xff]
  %v496 = vld [vmem:[%s2 + $0x558] sm:$0xff]
  %v497 = vld [vmem:[%s2 + $0x560] sm:$0xff]
  %v498 = vld [vmem:[%s2 + $0x568] sm:$0xff]
  %v499 = vld [vmem:[%s2 + $0x570] sm:$0xff]
  %v500 = vld [vmem:[%s2 + $0x578] sm:$0xff]
  %v501 = vld [vmem:[%s2 + $0x580] sm:$0xff]
  %v502 = vld [vmem:[%s2 + $0x588] sm:$0xff]
  %v503 = vld [vmem:[%s2 + $0x590] sm:$0xff]
  %v504 = vld [vmem:[%s2 + $0x598] sm:$0xff]
  %v505 = vld [vmem:[%s2 + $0x5a0] sm:$0xff]
  %v506 = vld [vmem:[%s2 + $0x5a8] sm:$0xff]
  %v507 = vld [vmem:[%s2 + $0x5b0] sm:$0xff]
  %v508 = vld [vmem:[%s2 + $0x5b8] sm:$0xff]
  %v509 = vld [vmem:[%s2 + $0x5c0] sm:$0xff]
  %v510 = vld [vmem:[%s2 + $0x5c8] sm:$0xff]
  %v511 = vld [vmem:[%s2 + $0x5d0] sm:$0xff]
  %v512 = vld [vmem:[%s2 + $0x5d8] sm:$0xff]
  %v513 = vld [vmem:[%s2 + $0x5e0] sm:$0xff]
  %v514 = vld [vmem:[%s2 + $0x5e8] sm:$0xff]
  %v515 = vld [vmem:[%s2 + $0x5f0] sm:$0xff]
  %v516 = vld [vmem:[%s2 + $0x5f8] sm:$0xff]
  %v517 = vlaneseq
  %v518 = vshrl.u32 %v517, 7
  %v519 = vsub.s32 2, %v518
  %v520 = vrot.slane %v212, %v519
  %v521 = vlaneseq
  %v522 = vshrl.u32 %v521, 7
  %v523 = vsub.s32 6, %v522
  %v524 = vrot.slane %v212, %v523
  %v527 = vlaneseq
  %v528 = vshrl.u32 %v527, 7
  %v529 = vsub.s32 2, %v528
  %v530 = vrot.slane %v520, %v529
  %v531 = vlaneseq
  %v532 = vshrl.u32 %v531, 7
  %v533 = vsub.s32 2, %v532
  %v534 = vrot.slane %v524, %v533
  %535 = vmatprep.subr.mxu0 %v326
  %536 = vmatpush1.msra.mxu0 %v325
  %537 = vmatprep.subr.mxu0 %v328
  %538 = vmatpush1.msra.mxu0 %v327
  %539 = vmatprep.subr.mxu0 %v330
  %540 = vmatpush1.msra.mxu0 %v329
  %541 = vmatprep.subr.mxu0 %v332
  %542 = vmatpush1.msra.mxu0 %v331
  %543 = vmatprep.subr.mxu0 %v334
  %544 = vmatpush1.msra.mxu0 %v333
  %545 = vmatprep.subr.mxu0 %v336
  %546 = vmatpush1.msra.mxu0 %v335
  %547 = vmatprep.subr.mxu0 %v338
  %548 = vmatpush1.msra.mxu0 %v337
  %549 = vmatprep.subr.mxu0 %v340
  %550 = vmatpush1.msra.mxu0 %v339
  %551 = vmatprep.subr.mxu0 %v342
  %552 = vmatpush1.msra.mxu0 %v341
  %553 = vmatprep.subr.mxu0 %v344
  %554 = vmatpush1.msra.mxu0 %v343
  %555 = vmatprep.subr.mxu0 %v346
  %556 = vmatpush1.msra.mxu0 %v345
  %557 = vmatprep.subr.mxu0 %v348
  %558 = vmatpush1.msra.mxu0 %v347
  %559 = vmatprep.subr.mxu0 %v350
  %560 = vmatpush1.msra.mxu0 %v349
  %561 = vmatprep.subr.mxu0 %v352
  %562 = vmatpush1.msra.mxu0 %v351
  %563 = vmatprep.subr.mxu0 %v354
  %564 = vmatpush1.msra.mxu0 %v353
  %565 = vmatprep.subr.mxu0 %v356
  %566 = vmatpush1.msra.mxu0 %v355
  %567 = vmatprep.subr.mxu0 %v358
  %568 = vmatpush1.msra.mxu0 %v357
  %569 = vmatprep.subr.mxu0 %v360
  %570 = vmatpush1.msra.mxu0 %v359
  %571 = vmatprep.subr.mxu0 %v362
  %572 = vmatpush1.msra.mxu0 %v361
  %573 = vmatprep.subr.mxu0 %v364
  %574 = vmatpush1.msra.mxu0 %v363
  %575 = vmatprep.subr.mxu0 %v366
  %576 = vmatpush1.msra.mxu0 %v365
  %577 = vmatprep.subr.mxu0 %v368
  %578 = vmatpush1.msra.mxu0 %v367
  %579 = vmatprep.subr.mxu0 %v370
  %580 = vmatpush1.msra.mxu0 %v369
  %581 = vmatprep.subr.mxu0 %v372
  %582 = vmatpush1.msra.mxu0 %v371
  %583 = vmatprep.subr.mxu0 %v374
  %584 = vmatpush1.msra.mxu0 %v373
  %585 = vmatprep.subr.mxu0 %v376
  %586 = vmatpush1.msra.mxu0 %v375
  %587 = vmatprep.subr.mxu0 %v378
  %588 = vmatpush1.msra.mxu0 %v377
  %589 = vmatprep.subr.mxu0 %v380
  %590 = vmatpush1.msra.mxu0 %v379
  %591 = vmatprep.subr.mxu0 %v382
  %592 = vmatpush1.msra.mxu0 %v381
  %593 = vmatprep.subr.mxu0 %v384
  %594 = vmatpush1.msra.mxu0 %v383
  %595 = vmatprep.subr.mxu0 %v386
  %596 = vmatpush1.msra.mxu0 %v385
  %597 = vmatprep.subr.mxu0 %v388
  %598 = vmatpush1.msra.mxu0 %v387
  %599 = vmatprep.mubr.f32.mxu0 %v276
  %600 = vmatmul.mubr.f32.gmra.mrb[0].mxu0 %v275
  %v601 = vpop.f32.mrb[0].mxu0
  %v602 = vadd.f32 %v530, %v601
  %v603 = vpop.f32.mrb[0].mxu0
  %v604 = vadd.f32 %v534, %v603
  %605 = vmatprep.mubr.f32.mxu0 %v278
  %606 = vmatmul.mubr.f32.gmra.mrb[0].mxu0 %v277
  %v607 = vpop.f32.mrb[0].mxu0
  %v608 = vadd.f32 %v530, %v607
  %v609 = vpop.f32.mrb[0].mxu0
  %v610 = vadd.f32 %v534, %v609
  %611 = vdwg.mxu0
  %612 = vmatprep.subr.mxu0 %v390
  %613 = vmatpush1.msra.mxu0 %v389
  %614 = vmatprep.subr.mxu0 %v392
  %615 = vmatpush1.msra.mxu0 %v391
  %616 = vmatprep.subr.mxu0 %v394
  %617 = vmatpush1.msra.mxu0 %v393
  %618 = vmatprep.subr.mxu0 %v396
  %619 = vmatpush1.msra.mxu0 %v395
  %620 = vmatprep.subr.mxu0 %v398
  %621 = vmatpush1.msra.mxu0 %v397
  %622 = vmatprep.subr.mxu0 %v400
  %623 = vmatpush1.msra.mxu0 %v399
  %624 = vmatprep.subr.mxu0 %v402
  %625 = vmatpush1.msra.mxu0 %v401
  %626 = vmatprep.subr.mxu0 %v404
  %627 = vmatpush1.msra.mxu0 %v403
  %628 = vmatprep.subr.mxu0 %v406
  %629 = vmatpush1.msra.mxu0 %v405
  %630 = vmatprep.subr.mxu0 %v408
  %631 = vmatpush1.msra.mxu0 %v407
  %632 = vmatprep.subr.mxu0 %v410
  %633 = vmatpush1.msra.mxu0 %v409
  %634 = vmatprep.subr.mxu0 %v412
  %635 = vmatpush1.msra.mxu0 %v411
  %636 = vmatprep.subr.mxu0 %v414
  %637 = vmatpush1.msra.mxu0 %v413
  %638 = vmatprep.subr.mxu0 %v416
  %639 = vmatpush1.msra.mxu0 %v415
  %640 = vmatprep.subr.mxu0 %v418
  %641 = vmatpush1.msra.mxu0 %v417
  %642 = vmatprep.subr.mxu0 %v420
  %643 = vmatpush1.msra.mxu0 %v419
  %644 = vmatprep.subr.mxu0 %v422
  %645 = vmatpush1.msra.mxu0 %v421
  %646 = vmatprep.subr.mxu0 %v424
  %647 = vmatpush1.msra.mxu0 %v423
  %648 = vmatprep.subr.mxu0 %v426
  %649 = vmatpush1.msra.mxu0 %v425
  %650 = vmatprep.subr.mxu0 %v428
  %651 = vmatpush1.msra.mxu0 %v427
  %652 = vmatprep.subr.mxu0 %v430
  %653 = vmatpush1.msra.mxu0 %v429
  %654 = vmatprep.subr.mxu0 %v432
  %655 = vmatpush1.msra.mxu0 %v431
  %656 = vmatprep.subr.mxu0 %v434
  %657 = vmatpush1.msra.mxu0 %v433
  %658 = vmatprep.subr.mxu0 %v436
  %659 = vmatpush1.msra.mxu0 %v435
  %660 = vmatprep.subr.mxu0 %v438
  %661 = vmatpush1.msra.mxu0 %v437
  %662 = vmatprep.subr.mxu0 %v440
  %663 = vmatpush1.msra.mxu0 %v439
  %664 = vmatprep.subr.mxu0 %v442
  %665 = vmatpush1.msra.mxu0 %v441
  %666 = vmatprep.subr.mxu0 %v444
  %667 = vmatpush1.msra.mxu0 %v443
  %668 = vmatprep.subr.mxu0 %v446
  %669 = vmatpush1.msra.mxu0 %v445
  %670 = vmatprep.subr.mxu0 %v448
  %671 = vmatpush1.msra.mxu0 %v447
  %672 = vmatprep.subr.mxu0 %v450
  %673 = vmatpush1.msra.mxu0 %v449
  %674 = vmatprep.subr.mxu0 %v452
  %675 = vmatpush1.msra.mxu0 %v451
  %676 = vmatprep.mubr.f32.mxu0 %v297
  %677 = vmatmul.mubr.f32.gmra.mrb[0].mxu0 %v294
  %v678 = vpop.f32.mrb[0].mxu0
  %v679 = vadd.f32 %v602, %v678
  %v680 = vpop.f32.mrb[0].mxu0
  %v681 = vadd.f32 %v604, %v680
  %682 = vmatprep.mubr.f32.mxu0 %v303
  %683 = vmatmul.mubr.f32.gmra.mrb[0].mxu0 %v300
  %v684 = vpop.f32.mrb[0].mxu0
  %v685 = vadd.f32 %v608, %v684
  %v686 = vpop.f32.mrb[0].mxu0
  %v687 = vadd.f32 %v610, %v686
  %688 = vdwg.mxu0
  %689 = vmatprep.subr.mxu0 %v454
  %690 = vmatpush1.msra.mxu0 %v453
  %691 = vmatprep.subr.mxu0 %v456
  %692 = vmatpush1.msra.mxu0 %v455
  %693 = vmatprep.subr.mxu0 %v458
  %694 = vmatpush1.msra.mxu0 %v457
  %695 = vmatprep.subr.mxu0 %v460
  %696 = vmatpush1.msra.mxu0 %v459
  %697 = vmatprep.subr.mxu0 %v462
  %698 = vmatpush1.msra.mxu0 %v461
  %699 = vmatprep.subr.mxu0 %v464
  %700 = vmatpush1.msra.mxu0 %v463
  %701 = vmatprep.subr.mxu0 %v466
  %702 = vmatpush1.msra.mxu0 %v465
  %703 = vmatprep.subr.mxu0 %v468
  %704 = vmatpush1.msra.mxu0 %v467
  %705 = vmatprep.subr.mxu0 %v470
  %706 = vmatpush1.msra.mxu0 %v469
  %707 = vmatprep.subr.mxu0 %v472
  %708 = vmatpush1.msra.mxu0 %v471
  %709 = vmatprep.subr.mxu0 %v474
  %710 = vmatpush1.msra.mxu0 %v473
  %711 = vmatprep.subr.mxu0 %v476
  %712 = vmatpush1.msra.mxu0 %v475
  %713 = vmatprep.subr.mxu0 %v478
  %714 = vmatpush1.msra.mxu0 %v477
  %715 = vmatprep.subr.mxu0 %v480
  %716 = vmatpush1.msra.mxu0 %v479
  %717 = vmatprep.subr.mxu0 %v482
  %718 = vmatpush1.msra.mxu0 %v481
  %719 = vmatprep.subr.mxu0 %v484
  %720 = vmatpush1.msra.mxu0 %v483
  %721 = vmatprep.subr.mxu0 %v486
  %722 = vmatpush1.msra.mxu0 %v485
  %723 = vmatprep.subr.mxu0 %v488
  %724 = vmatpush1.msra.mxu0 %v487
  %725 = vmatprep.subr.mxu0 %v490
  %726 = vmatpush1.msra.mxu0 %v489
  %727 = vmatprep.subr.mxu0 %v492
  %728 = vmatpush1.msra.mxu0 %v491
  %729 = vmatprep.subr.mxu0 %v494
  %730 = vmatpush1.msra.mxu0 %v493
  %731 = vmatprep.subr.mxu0 %v496
  %732 = vmatpush1.msra.mxu0 %v495
  %733 = vmatprep.subr.mxu0 %v498
  %734 = vmatpush1.msra.mxu0 %v497
  %735 = vmatprep.subr.mxu0 %v500
  %736 = vmatpush1.msra.mxu0 %v499
  %737 = vmatprep.subr.mxu0 %v502
  %738 = vmatpush1.msra.mxu0 %v501
  %739 = vmatprep.subr.mxu0 %v504
  %740 = vmatpush1.msra.mxu0 %v503
  %741 = vmatprep.subr.mxu0 %v506
  %742 = vmatpush1.msra.mxu0 %v505
  %743 = vmatprep.subr.mxu0 %v508
  %744 = vmatpush1.msra.mxu0 %v507
  %745 = vmatprep.subr.mxu0 %v510
  %746 = vmatpush1.msra.mxu0 %v509
  %747 = vmatprep.subr.mxu0 %v512
  %748 = vmatpush1.msra.mxu0 %v511
  %749 = vmatprep.subr.mxu0 %v514
  %750 = vmatpush1.msra.mxu0 %v513
  %751 = vmatprep.subr.mxu0 %v516
  %752 = vmatpush1.msra.mxu0 %v515
  %753 = vmatprep.mubr.f32.mxu0 %v314
  %754 = vmatmul.mubr.f32.gmra.mrb[0].mxu0 %v311
  %v755 = vpop.f32.mrb[0].mxu0
  %v756 = vadd.f32 %v679, %v755
  %v757 = vpop.f32.mrb[0].mxu0
  %v758 = vadd.f32 %v681, %v757
  %759 = vmatprep.mubr.f32.mxu0 %v320
  %760 = vmatmul.mubr.f32.gmra.mrb[0].mxu0 %v317
  %v761 = vpop.f32.mrb[0].mxu0
  %v762 = vadd.f32 %v685, %v761
  %v763 = vpop.f32.mrb[0].mxu0
  %v764 = vadd.f32 %v687, %v763
  %765 = vdwg.mxu0
  %v766 = vadd.f32 %v756, %v258
  %v767 = vadd.f32 %v758, %v259
  %v768 = vadd.f32 %v762, %v260
  %v769 = vadd.f32 %v764, %v261
  %v770 = vmax.f32 %v766, 0.0
  %v771 = vmax.f32 %v767, 0.0
  %v772 = vmax.f32 %v768, 0.0
  %v773 = vmax.f32 %v769, 0.0
  %774 = vst [vmem:[%s4] sm:$0xff] %v770
  %775 = vst [vmem:[%s4 + $0x8] sm:$0xff] %v771
  %776 = vst [vmem:[%s4 + $0x10] sm:$0xff] %v772
  %777 = vst [vmem:[%s4 + $0x18] sm:$0xff] %v773
  // Predicated region
  $region18: #{st_gcn_forward.1} parent=0 // pred_check
    _
  $region19: #{st_gcn_forward.1} parent=0 // pred_check_branch
    %779 = sbr.rel (0) target = $region21
  $region20: #{st_gcn_forward.1} parent=0 // pred_region
    _
  $region21: #{st_gcn_forward.1} parent=0 // pred_fallthru
    _
  // Predicated region
  $region22: #{st_gcn_forward.1} parent=0 // pred_check
    _
  $region23: #{st_gcn_forward.1} parent=0 // pred_check_branch
    %781 = sbr.rel (0) target = $region25
  $region24: #{st_gcn_forward.1} parent=0 // pred_region
    _
  $region25: #{st_gcn_forward.1} parent=0 // pred_fallthru
    _

</llo_original>
